<compile_context>
chip_gen: v7x
topology: tpu7x:2x2x1
jax: 0.10.0
libtpu: 0.0.40
codegen_flags: <defaults>
</compile_context>

<pallas_src>
import numpy as np
import jax
import jax.numpy as jnp
from jax import lax
from jax.experimental import pallas as pl
from jax.experimental.pallas import tpu as pltpu


def _cdiv(a, b):
    return -(-a // b)


def _vmem_limit_bytes(default=32 * 1024 * 1024):
    """Generation-aware scoped-VMEM request: ~half of physical VMEM.

    v7x: 64 MiB -> 32 MiB; v5e/v6e: 128 MiB -> 64 MiB; conservative default if
    the query is unavailable.
    """
    try:
        cap = int(pltpu.get_tpu_info().vmem_capacity_bytes)
        return int(min(max(cap // 2, default), 100 * 1024 * 1024))
    except Exception:
        return default


def _make_confusion_kernel(C, HW, TP, TPS, n_tiles, fully_aligned):
    """Kernel factory closing over static C, H*W, tile sizes and mask mode."""

    def kernel(pred_ref, tgt_ref, out_ref):
        s = pl.program_id(0)    # shard (core-parallel) index
        ni = pl.program_id(1)   # batch index
        ti = pl.program_id(2)   # pixel-tile index within the shard

        # Zero this shard's output slab on its first visit; it stays
        # VMEM-resident across all (batch, tile) steps of this shard.
        @pl.when(jnp.logical_and(ni == 0, ti == 0))
        def _():
            out_ref[...] = jnp.zeros_like(out_ref)

        p = pred_ref[0].astype(jnp.float32)      # (C, TP) logits, pixels on lanes
        # Match np/torch argmax on NaN inputs: NaN compares as maximal.
        p = jnp.where(jnp.isnan(p), jnp.inf, p)
        tgt = tgt_ref[0].astype(jnp.int32)       # (1, TP) labels, pixels on lanes

        # First-occurrence argmax over the class (sublane) axis.
        iota_c = lax.broadcasted_iota(jnp.int32, (C, TP), 0)      # (C, TP)
        maxv = jnp.max(p, axis=0, keepdims=True)                  # (1, TP)
        best = jnp.min(jnp.where(p == maxv, iota_c, C),
                       axis=0, keepdims=True)                     # (1, TP)

        pred_oh = iota_c == best                                  # (C, TP) bool
        # Target one-hot: labels outside [0, C) match no row -> dropped,
        # matching confusion_matrix(..., labels=range(C)).
        tgt_oh = (iota_c == tgt).astype(jnp.bfloat16)             # (C, TP) bf16

        def accumulate(pred_mask):
            # MXU: bf16 one-hot @ one-hot^T, contract over the pixel (lane) axis.
            conf = lax.dot_general(
                pred_mask.astype(jnp.bfloat16), tgt_oh,
                (((1,), (1,)), ((), ())),
                preferred_element_type=jnp.float32)               # (C, C) exact
            out_ref[0] += conf.astype(jnp.int32)

        if fully_aligned:
            # HW divisible by TP and tiles divide evenly across shards:
            # no validity mask anywhere.
            accumulate(pred_oh)
        else:
            gt = s * TPS + ti                     # global pixel-tile index
            is_edge = gt >= n_tiles - 1           # partial last tile or OOB dup

            @pl.when(jnp.logical_not(is_edge))
            def _():
                accumulate(pred_oh)

            @pl.when(is_edge)
            def _():
                lane = lax.broadcasted_iota(jnp.int32, (1, TP), 1)
                valid = (gt * TP + lane) < HW     # (1, TP) bool
                accumulate(jnp.logical_and(pred_oh, valid))

    return kernel


def confusion_matrix_pallas(pred, target, num_classes, *,
                            max_tile_pixels=32768,
                            pred_buffer_budget_bytes=12 * 1024 * 1024,
                            num_shards=2):
    """pred: (N, C, H, W) float logits; target: (N, H, W) int labels -> (C, C) int32.

    matrix[i, j] = #pixels with argmax(pred) == i and target == j
    (same orientation as confusion_matrix(pred, target, labels=range(C))).
    """
    n, c, h, w = pred.shape
    assert c == num_classes
    hw = h * w

    # Keep native dtypes (no whole-array cast passes in HBM).
    if pred.dtype not in (jnp.float32, jnp.bfloat16, jnp.float16):
        pred = pred.astype(jnp.float32)
    if not jnp.issubdtype(target.dtype, jnp.integer):
        target = target.astype(jnp.int32)

    # Free reshapes (merge trailing dims): channels on sublanes, pixels on lanes.
    p3 = pred.reshape(n, c, hw)          # (N, C, HW)
    t3 = target.reshape(n, 1, hw)        # (N, 1, HW)

    # Pixel tile: as large as the pred double-buffer budget allows (multiple of
    # 128), capped at max_tile_pixels; a single ragged tile if HW is small.
    itemsize = jnp.dtype(p3.dtype).itemsize
    tp = min(max_tile_pixels,
             max(pred_buffer_budget_bytes // (2 * c * itemsize), 128))
    tp = max(128, (tp // 128) * 128)
    if hw <= tp:
        tp = hw
    n_tiles = _cdiv(hw, tp)

    shards = num_shards if n_tiles >= num_shards else 1
    tps = _cdiv(n_tiles, shards)
    fully_aligned = (n_tiles * tp == hw) and (shards * tps == n_tiles)

    if shards * tps == n_tiles:
        def tile_idx(s, j):
            return s * tps + j
    else:
        # Shards don't divide the tile count evenly: clamp the block index so
        # the DMA stays in range; the kernel masks the duplicate tile to zero.
        def tile_idx(s, j):
            return jnp.minimum(s * tps + j, n_tiles - 1)

    kernel = _make_confusion_kernel(c, hw, tp, tps, n_tiles, fully_aligned)

    out = pl.pallas_call(
        kernel,
        out_shape=jax.ShapeDtypeStruct((shards, c, c), jnp.int32),
        grid_spec=pltpu.PrefetchScalarGridSpec(
            num_scalar_prefetch=0,
            grid=(shards, n, tps),
            in_specs=[
                pl.BlockSpec((1, c, tp), lambda s, i, j: (i, 0, tile_idx(s, j))),
                pl.BlockSpec((1, 1, tp), lambda s, i, j: (i, 0, tile_idx(s, j))),
            ],
            out_specs=pl.BlockSpec((1, c, c), lambda s, i, j: (s, 0, 0)),
        ),
        compiler_params=pltpu.CompilerParams(
            dimension_semantics=("parallel", "arbitrary", "arbitrary"),
            vmem_limit_bytes=_vmem_limit_bytes()),
    )(p3, t3)

    # Per-shard partial matrices summed outside the kernel (v7x 2-TC split).
    return out.sum(axis=0, dtype=jnp.int32)


class wIoU:
    """JAX/Pallas port of the PyTorch wIoU metric module."""

    def __init__(self, C):
        self.C = C
        self.reset()

    def reset(self):
        self.matrix = np.zeros((self.C, self.C), dtype=np.int32)

    def forward(self, pred, target):
        if pred.shape[-2:] != tuple(target.shape[-2:]):
            # bilinear, half-pixel centers == torch interpolate(align_corners=False)
            # for upsampling.
            # TODO(synk): for *downsampling*, jax.image.resize applies anti-aliasing
            # while torch's default (antialias=False) does not, so that branch can
            # diverge slightly from the PyTorch reference.
            pred = jax.image.resize(
                pred, pred.shape[:2] + tuple(target.shape[-2:]), method="bilinear")
        m = confusion_matrix_pallas(pred, target, self.C)
        self.matrix += np.asarray(jax.block_until_ready(m))

    def get(self):
        f = np.sum(self.matrix, 0) / np.sum(self.matrix)
        diag = np.diag(self.matrix)
        iu = diag / (np.sum(self.matrix, 1) + np.sum(self.matrix, 0) - diag)
        return (f[f > 0] * iu[f > 0]).sum()


if __name__ == "__main__":
    key = jax.random.PRNGKey(0)
    kp, kt = jax.random.split(key)
    N, C, H, W = 2, 4, 16, 16
    pred = jax.random.normal(kp, (N, C, H, W), dtype=jnp.float32)
    target = jax.random.randint(kt, (N, H, W), 0, C, dtype=jnp.int32)

    m = jax.block_until_ready(confusion_matrix_pallas(pred, target, C))

    # pure-numpy reference (argmax over channels + confusion matrix)
    p_np = np.asarray(pred)
    t_np = np.asarray(target).reshape(-1)
    am = np.argmax(np.transpose(p_np, (0, 2, 3, 1)).reshape(-1, C), axis=-1)
    ref = np.zeros((C, C), dtype=np.int32)
    np.add.at(ref, (am, t_np), 1)
    assert np.array_equal(np.asarray(m), ref), (np.asarray(m), ref)

    # exercise the stateful module path (accumulate + get) like the PyTorch module
    metric = wIoU(C)
    metric.forward(pred, target)
    _ = metric.get()

    print("KERNEL_OK")
</pallas_src>

<mosaic_0001>
module attributes {stable_mosaic.version = 11 : i64} {
  func.func @kernel(%arg0: i32, %arg1: i32, %arg2: i32, %arg3: memref<1x4x256xf32, #tpu.memory_space<vmem>>, %arg4: memref<1x1x256xi32, #tpu.memory_space<vmem>>, %arg5: memref<1x4x4xi32, #tpu.memory_space<vmem>>) attributes {dimension_semantics = [#tpu.dimension_semantics<parallel>, #tpu.dimension_semantics<arbitrary>, #tpu.dimension_semantics<arbitrary>], iteration_bounds = array<i64: 1, 2, 1>, scalar_prefetch = 0 : i64, scratch_operands = 0 : i64, tpu.core_type = #tpu.core_type<tc>, window_params = [{transform_indices = @transform_0, window_bounds = array<i64: 1, 4, 256>}, {transform_indices = @transform_1, window_bounds = array<i64: 1, 1, 256>}, {transform_indices = @transform_2, window_bounds = array<i64: 1, 4, 4>}]} {
    %c0_i32 = arith.constant 0 : i32
    %0 = arith.cmpi eq, %arg1, %c0_i32 : i32
    %c0_i32_0 = arith.constant 0 : i32
    %1 = arith.cmpi eq, %arg2, %c0_i32_0 : i32
    %2 = arith.andi %0, %1 : i1
    %3 = arith.extui %2 : i1 to i32
    %c0_i32_1 = arith.constant 0 : i32
    %4 = arith.cmpi ne, %3, %c0_i32_1 : i32
    scf.if %4 {
      %c0_i32_16 = arith.constant 0 : i32
      %39 = vector.broadcast %c0_i32_16 : i32 to vector<1x4x4xi32>
      %c0_17 = arith.constant 0 : index
      %c0_18 = arith.constant 0 : index
      %c0_19 = arith.constant 0 : index
      %40 = vector.load %arg5[%c0_17, %c0_18, %c0_19] : memref<1x4x4xi32, #tpu.memory_space<vmem>>, vector<1x4x4xi32>
      tpu.vector_store %arg5[%c0_17, %c0_18, %c0_19], %39 {strides = array<i32>} : memref<1x4x4xi32, #tpu.memory_space<vmem>>, vector<1x4x4xi32>,
    } else {
    }
    %c0 = arith.constant 0 : index
    %c0_2 = arith.constant 0 : index
    %c0_3 = arith.constant 0 : index
    %5 = vector.load %arg3[%c0, %c0_2, %c0_3] : memref<1x4x256xf32, #tpu.memory_space<vmem>>, vector<1x4x256xf32>
    %6 = vector.shape_cast %5 : vector<1x4x256xf32> to vector<4x256xf32>
    %7 = arith.cmpf one, %6, %6 : vector<4x256xf32>
    %cst = arith.constant 0x7F800000 : f32
    %8 = vector.broadcast %cst : f32 to vector<4x256xf32>
    %9 = arith.select %7, %8, %6 : vector<4x256xi1>, vector<4x256xf32>
    %c0_4 = arith.constant 0 : index
    %c0_5 = arith.constant 0 : index
    %c0_6 = arith.constant 0 : index
    %10 = vector.load %arg4[%c0_4, %c0_5, %c0_6] : memref<1x1x256xi32, #tpu.memory_space<vmem>>, vector<1x1x256xi32>
    %11 = vector.shape_cast %10 : vector<1x1x256xi32> to vector<1x256xi32>
    %12 = tpu.iota {dimensions = array<i32: 0>} : vector<4x256xi32>
    %cst_7 = arith.constant dense<0xFF800000> : vector<256xf32>
    %13 = vector.multi_reduction <maximumf>, %9, %cst_7 [0] : vector<4x256xf32> to vector<256xf32>
    %14 = vector.shape_cast %13 : vector<256xf32> to vector<1x256xf32>
    %15 = vector.broadcast %14 : vector<1x256xf32> to vector<4x256xf32>
    %16 = arith.cmpf oeq, %9, %15 : vector<4x256xf32>
    %c4_i32 = arith.constant 4 : i32
    %17 = vector.broadcast %c4_i32 : i32 to vector<4x256xi32>
    %18 = arith.select %16, %12, %17 : vector<4x256xi1>, vector<4x256xi32>
    %cst_8 = arith.constant dense<2147483647> : vector<256xi32>
    %19 = vector.multi_reduction <minsi>, %18, %cst_8 [0] : vector<4x256xi32> to vector<256xi32>
    %20 = vector.shape_cast %19 : vector<256xi32> to vector<1x256xi32>
    %21 = vector.broadcast %20 : vector<1x256xi32> to vector<4x256xi32>
    %22 = arith.cmpi eq, %12, %21 : vector<4x256xi32>
    %23 = vector.broadcast %11 : vector<1x256xi32> to vector<4x256xi32>
    %24 = arith.cmpi eq, %12, %23 : vector<4x256xi32>
    %25 = arith.extui %24 : vector<4x256xi1> to vector<4x256xi32>
    %26 = arith.sitofp %25 : vector<4x256xi32> to vector<4x256xf32>
    %27 = arith.truncf %26 : vector<4x256xf32> to vector<4x256xbf16>
    %28 = arith.extui %22 : vector<4x256xi1> to vector<4x256xi32>
    %29 = arith.sitofp %28 : vector<4x256xi32> to vector<4x256xf32>
    %30 = arith.truncf %29 : vector<4x256xf32> to vector<4x256xbf16>
    %cst_9 = arith.constant dense<0.000000e+00> : vector<4x4xf32>
    %31 = tpu.matmul %30, %27, %cst_9 {dimension_numbers = #tpu.dot_dimension_numbers<[1], [1], [0], [0], [0, 0, 1, 0], [], []>} : vector<4x256xbf16>, vector<4x256xbf16>, vector<4x4xf32> -> vector<4x4xf32>
    %c0_10 = arith.constant 0 : index
    %c0_11 = arith.constant 0 : index
    %c0_12 = arith.constant 0 : index
    %32 = vector.load %arg5[%c0_10, %c0_11, %c0_12] : memref<1x4x4xi32, #tpu.memory_space<vmem>>, vector<1x4x4xi32>
    %33 = vector.shape_cast %32 : vector<1x4x4xi32> to vector<4x4xi32>
    %34 = arith.fptosi %31 : vector<4x4xf32> to vector<4x4xi32>
    %35 = arith.addi %33, %34 : vector<4x4xi32>
    %c0_13 = arith.constant 0 : index
    %c0_14 = arith.constant 0 : index
    %c0_15 = arith.constant 0 : index
    %36 = vector.load %arg5[%c0_13, %c0_14, %c0_15] : memref<1x4x4xi32, #tpu.memory_space<vmem>>, vector<1x4x4xi32>
    %37 = vector.shape_cast %36 : vector<1x4x4xi32> to vector<4x4xi32>
    %38 = vector.shape_cast %35 : vector<4x4xi32> to vector<1x4x4xi32>
    tpu.vector_store %arg5[%c0_13, %c0_14, %c0_15], %38 {strides = array<i32>} : memref<1x4x4xi32, #tpu.memory_space<vmem>>, vector<1x4x4xi32>,
    return
  }
  func.func @transform_0(%arg0: i32, %arg1: i32, %arg2: i32) -> (i32, i32, i32) {
    %c1_i32 = arith.constant 1 : i32
    %0 = arith.muli %arg0, %c1_i32 : i32
    %1 = arith.addi %0, %arg2 : i32
    %c0_i32 = arith.constant 0 : i32
    %c0_i32_0 = arith.constant 0 : i32
    return %arg1, %c0_i32, %1 : i32, i32, i32
  }
  func.func @transform_1(%arg0: i32, %arg1: i32, %arg2: i32) -> (i32, i32, i32) {
    %c1_i32 = arith.constant 1 : i32
    %0 = arith.muli %arg0, %c1_i32 : i32
    %1 = arith.addi %0, %arg2 : i32
    %c0_i32 = arith.constant 0 : i32
    %c0_i32_0 = arith.constant 0 : i32
    return %arg1, %c0_i32, %1 : i32, i32, i32
  }
  func.func @transform_2(%arg0: i32, %arg1: i32, %arg2: i32) -> (i32, i32, i32) {
    %c0_i32 = arith.constant 0 : i32
    %c0_i32_0 = arith.constant 0 : i32
    %c0_i32_1 = arith.constant 0 : i32
    return %arg0, %c0_i32, %c0_i32_0 : i32, i32, i32
  }
}

</mosaic_0001>

<llo_original>
// kernel: tpu_custom_call.1
$region0: #{tpu_custom_call.1}
  #allocation0 [shape = 'u32[]', space=smem, size = 0x4, offset = 0x4, fixed_abs, tag = 'smem constant byte address 0x4 - core index']
  #allocation1 [shape = 'u32[144,128]{1,0:T(1,128)}', space=vmem, size = 0x12000, scoped, tag = 'internal scratch']
  %s0 = inlined_call_operand.hbm [shape: f32[2,4,256], index: 0, kind: input, shape index: {}]
  %s1 = inlined_call_operand.hbm [shape: s32[2,1,256], index: 1, kind: input, shape index: {}]
  %s2 = inlined_call_operand.hbm [shape: s32[1,4,4], index: 2, kind: output, shape index: {}]
  %s3 = sld [smem:[#allocation0]]
  $region53: #{tpu_custom_call.1} parent=0
    _
  %s5 = ssub.s32 1, %s3
  %s6 = scalar_select 0, %s5, %s3
  $region1: #{tpu_custom_call.1} parent=0
    #allocation2 [shape = 'u8[8192]{0}', space=vmem, size = 0x2000, scoped, tag = 'input window, operand 0']
    #allocation3 [shape = 's32[2]{0}', space=sflag, size = 0x8, scoped, tag = 'scoped memory for tpu_custom_call.1']
    #allocation4 [shape = 's32[2]{0}', space=sflag, size = 0x8, scoped, tag = 'scoped memory for tpu_custom_call.1']
    #allocation5 [shape = 'u8[2048]{0}', space=vmem, size = 0x800, scoped, tag = 'input window, operand 1']
    #allocation6 [shape = 's32[2]{0}', space=sflag, size = 0x8, scoped, tag = 'scoped memory for tpu_custom_call.1']
    #allocation7 [shape = 'u8[2048]{0}', space=vmem, size = 0x800, scoped, tag = 'output window, operand 0, single buffered']
    %7 = vsyncpa [#allocation3], 0
    %s8 = scalar_lea.sflag [#allocation3], 1
    %9 = vsyncpa %s8, 0
    %10 = vsyncpa [#allocation6], 0
    %s11 = scalar_lea.sflag [#allocation6], 1
    %12 = vsyncpa %s11, 0
    %13 = vsyncpa [#allocation4], 0
    loop: start=0, step=1, limit=4
    $region2: #{tpu_custom_call.1} parent=1 // loop_pre_header
      _
    $region3: #{tpu_custom_call.1} parent=1 // loop_header
      %s15 = sphi 0, %s19
      %p16 = scmp.ge.s32.totalorder %s15, 4
      %s22 = sphi 0, %s41
      %s23 = sphi 0, %s37
      %s24 = sphi 0, %s33
      %s25 = sphi 0, %s22
      %s26 = sphi 0, %s23
      %s27 = sphi 0, %s24
      %s28 = sphi 0, %s25
      %s29 = sphi 0, %s26
      %s30 = sphi 0, %s27
      %s48 = sphi 0, %s50
      %s51 = sphi 0, %s48
      %s52 = sphi 0, %s51
      %s68 = sphi 0, %s52
      %s78 = sphi 0, %s80
      %s81 = sphi 0, %s78
      %s82 = sphi 0, %s81
      %s98 = sphi 0, %s82
      %s104 = sphi 0, %s106
      %s107 = sphi 0, %s104
      %s108 = sphi 0, %s107
      %s124 = sphi 0, %s108
    $region4: #{tpu_custom_call.1} parent=1 // loop_header_branch
      %18 = sbr.rel (%p16) target = $region8
    $region5: #{tpu_custom_call.1} parent=1 // loop_body
      %s20 = ssub.s32 %s15, 1
      %s21 = ssub.s32 %s15, 2
      %s31 = sadd.s32 1, %s24
      %p32 = scmp.ge.s32.totalorder %s31, 1
      %s33 = scalar_select %p32, 0, %s31
      %s34 = sadd.s32 1, %s23
      %s35 = scalar_select %p32, %s34, %s23
      %p36 = scmp.ge.s32.totalorder %s35, 2
      %s37 = scalar_select %p36, 0, %s35
      %s38 = sadd.s32 1, %s22
      %s39 = scalar_select %p36, %s38, %s22
      %p40 = scmp.ge.s32.totalorder %s39, 1
      %s41 = scalar_select %p40, 0, %s39
      %s42 = sadd.s32 %s22, %s24
      %s43 = sadd.s32 %s41, %s33
      %s44 = ssub.s32 %s23, %s37
      %s45 = ssub.s32 %s42, %s43
      %s46 = sor.u32 %s44, %s45
      %p47 = scmp.eq.s32.totalorder %s46, 0
      %s49 = sadd.s32 %s48, 1
      %s50 = scalar_select %p47, %s48, %s49
      %p53 = pneg %p47
      %p54 = scmp.eq.s32.totalorder %s15, 1
      %p55 = por %p53, %p54
      %p56 = scmp.ne.s32.totalorder %s48, %s51
      %p57 = scmp.eq.s32.totalorder %s15, 0
      %p58 = por %p56, %p57
      %p59 = scmp.ne.s32.totalorder %s48, %s51
      %p60 = scmp.eq.s32.totalorder %s20, 1
      %p61 = por %p59, %p60
      %p62 = scmp.ne.s32.totalorder %s51, %s52
      %p63 = scmp.eq.s32.totalorder %s20, 0
      %p64 = por %p62, %p63
      %p65 = scmp.ne.s32.totalorder %s51, %s52
      %p66 = scmp.eq.s32.totalorder %s21, 1
      %p67 = por %p65, %p66
      %p69 = scmp.ne.s32.totalorder %s52, %s68
      %p70 = scmp.eq.s32.totalorder %s21, 0
      %p71 = por %p69, %p70
      %s72 = sadd.s32 %s22, %s24
      %s73 = sadd.s32 %s41, %s33
      %s74 = ssub.s32 %s23, %s37
      %s75 = ssub.s32 %s72, %s73
      %s76 = sor.u32 %s74, %s75
      %p77 = scmp.eq.s32.totalorder %s76, 0
      %s79 = sadd.s32 %s78, 1
      %s80 = scalar_select %p77, %s78, %s79
      %p83 = pneg %p77
      %p84 = scmp.eq.s32.totalorder %s15, 1
      %p85 = por %p83, %p84
      %p86 = scmp.ne.s32.totalorder %s78, %s81
      %p87 = scmp.eq.s32.totalorder %s15, 0
      %p88 = por %p86, %p87
      %p89 = scmp.ne.s32.totalorder %s78, %s81
      %p90 = scmp.eq.s32.totalorder %s20, 1
      %p91 = por %p89, %p90
      %p92 = scmp.ne.s32.totalorder %s81, %s82
      %p93 = scmp.eq.s32.totalorder %s20, 0
      %p94 = por %p92, %p93
      %p95 = scmp.ne.s32.totalorder %s81, %s82
      %p96 = scmp.eq.s32.totalorder %s21, 1
      %p97 = por %p95, %p96
      %p99 = scmp.ne.s32.totalorder %s82, %s98
      %p100 = scmp.eq.s32.totalorder %s21, 0
      %p101 = por %p99, %p100
      %s102 = ssub.s32 %s22, %s41
      %p103 = scmp.eq.s32.totalorder %s102, 0
      %s105 = sadd.s32 %s104, 1
      %s106 = scalar_select %p103, %s104, %s105
      %p109 = pneg %p103
      %p110 = scmp.eq.s32.totalorder %s15, 1
      %p111 = por %p109, %p110
      %p112 = scmp.ne.s32.totalorder %s104, %s107
      %p113 = scmp.eq.s32.totalorder %s15, 0
      %p114 = por %p112, %p113
      %p115 = scmp.ne.s32.totalorder %s104, %s107
      %p116 = scmp.eq.s32.totalorder %s20, 1
      %p117 = por %p115, %p116
      %p118 = scmp.ne.s32.totalorder %s107, %s108
      %p119 = scmp.eq.s32.totalorder %s20, 0
      %p120 = por %p118, %p119
      %p121 = scmp.ne.s32.totalorder %s107, %s108
      %p122 = scmp.eq.s32.totalorder %s21, 1
      %p123 = por %p121, %p122
      %p125 = scmp.ne.s32.totalorder %s108, %s124
      %p126 = scmp.eq.s32.totalorder %s21, 0
      %p127 = por %p125, %p126
      %p128 = scmp.le.s32.totalorder 1, %s15
      %p129 = scmp.lt.s32.totalorder %s15, 3
      %p130 = pnand %p128, %p129
      %p131 = pneg %p130
      // Predicated region
      $region9: #{tpu_custom_call.1} parent=5 // pred_check
        _
      $region10: #{tpu_custom_call.1} parent=5 // pred_check_branch
        %133 = sbr.rel (%p130) target = $region12
      $region11: #{tpu_custom_call.1} parent=5 // pred_region
        %s134 = ssub.s32 %s15, 1
      $region12: #{tpu_custom_call.1} parent=5 // pred_fallthru
        _
      %p135 = scmp.lt.s32.totalorder %s15, 2
      // Predicated region
      $region13: #{tpu_custom_call.1} parent=5 // pred_check
        %p136 = pneg %p135
      $region14: #{tpu_custom_call.1} parent=5 // pred_check_branch
        %138 = sbr.rel (%p136) target = $region16
      $region15: #{tpu_custom_call.1} parent=5 // pred_region
        // Predicated region
        $region17: #{tpu_custom_call.1} parent=15 // pred_check
          %p139 = pneg %p58
        $region18: #{tpu_custom_call.1} parent=15 // pred_check_branch
          %141 = sbr.rel (%p139) target = $region20
        $region19: #{tpu_custom_call.1} parent=15 // pred_region
          %s142 = sand.u32 %s48, 1
          %s143 = scalar_lea.sflag [#allocation3], %s142
          %s144 = sand.u32 %s48, 1
          %s145 = smul.addr %s144, 8
          %s146 = scalar_lea.vmem [#allocation2], %s145
          %s147 = sadd.s32 %s22, %s24
          %s148 = smul.u32 2, %s147
          %s150 = ssub.s32 128, 128
          %151 = vsyncadd %s143, %s150
          %s152 = smul.addr %s23, 2
          %s153 = sadd.s32 %s148, %s152
          %s154 = smul.addr %s153, 64
          %s155 = scalar_lea.hbm %s0, %s154
          %s157 = sshll.u32 %s146, 4
          %s158 = int_to_ptr.vmem [resolvable:$true] %s157
          %160 = dma.hbm_to_vmem [thread:$0]  %s155, 128, %s158, %s143
        $region20: #{tpu_custom_call.1} parent=15 // pred_fallthru
          _
        // Predicated region
        $region21: #{tpu_custom_call.1} parent=15 // pred_check
          %p161 = pneg %p88
        $region22: #{tpu_custom_call.1} parent=15 // pred_check_branch
          %163 = sbr.rel (%p161) target = $region24
        $region23: #{tpu_custom_call.1} parent=15 // pred_region
          %s164 = sand.u32 %s78, 1
          %s165 = scalar_lea.sflag [#allocation6], %s164
          %s166 = sand.u32 %s78, 1
          %s167 = smul.addr %s166, 2
          %s168 = scalar_lea.vmem [#allocation5], %s167
          %s169 = sadd.s32 %s22, %s24
          %s170 = smul.u32 2, %s169
          %s172 = ssub.s32 32, 32
          %173 = vsyncadd %s165, %s172
          %s174 = smul.addr %s23, 2
          %s175 = sadd.s32 %s170, %s174
          %s176 = smul.addr %s175, 16
          %s177 = scalar_lea.hbm %s1, %s176
          %s179 = sshll.u32 %s168, 4
          %s180 = int_to_ptr.vmem [resolvable:$true] %s179
          %182 = dma.hbm_to_vmem [thread:$0]  %s177, 32, %s180, %s165
        $region24: #{tpu_custom_call.1} parent=15 // pred_fallthru
          _
      $region16: #{tpu_custom_call.1} parent=5 // pred_fallthru
        _
      %p183 = scmp.le.s32.totalorder 1, %s15
      %p184 = scmp.lt.s32.totalorder %s15, 3
      %p185 = pnand %p183, %p184
      %p186 = pneg %p185
      // Predicated region
      $region25: #{tpu_custom_call.1} parent=5 // pred_check
        _
      $region26: #{tpu_custom_call.1} parent=5 // pred_check_branch
        %188 = sbr.rel (%p185) target = $region28
      $region27: #{tpu_custom_call.1} parent=5 // pred_region
        %s189 = ssub.s32 %s15, 1
        %s190 = sand.u32 %s51, 1
        %s191 = scalar_lea.sflag [#allocation3], %s190
        %s192 = sand.u32 %s51, 1
        %s193 = smul.addr %s192, 8
        %s194 = scalar_lea.vmem [#allocation2], %s193
        // Predicated region
        $region29: #{tpu_custom_call.1} parent=27 // pred_check
          %p195 = pneg %p64
        $region30: #{tpu_custom_call.1} parent=27 // pred_check_branch
          %197 = sbr.rel (%p195) target = $region32
        $region31: #{tpu_custom_call.1} parent=27 // pred_region
          %198 = dma.done %s191, 128
        $region32: #{tpu_custom_call.1} parent=27 // pred_fallthru
          _
        %s199 = sand.u32 %s81, 1
        %s200 = scalar_lea.sflag [#allocation6], %s199
        %s201 = sand.u32 %s81, 1
        %s202 = smul.addr %s201, 2
        %s203 = scalar_lea.vmem [#allocation5], %s202
        // Predicated region
        $region33: #{tpu_custom_call.1} parent=27 // pred_check
          %p204 = pneg %p94
        $region34: #{tpu_custom_call.1} parent=27 // pred_check_branch
          %206 = sbr.rel (%p204) target = $region36
        $region35: #{tpu_custom_call.1} parent=27 // pred_region
          %207 = dma.done %s200, 32
        $region36: #{tpu_custom_call.1} parent=27 // pred_fallthru
          _
        %s208 = sand.u32 %s51, 1
        %s209 = scalar_lea.sflag [#allocation3], %s208
        %s210 = sand.u32 %s51, 1
        %s211 = smul.addr %s210, 8
        %s212 = scalar_lea.vmem [#allocation2], %s211
        %p213 = pneg %p64
        %p214 = pneg %p61
        %s215 = sand.u32 %s81, 1
        %s216 = scalar_lea.sflag [#allocation6], %s215
        %s217 = sand.u32 %s81, 1
        %s218 = smul.addr %s217, 2
        %s219 = scalar_lea.vmem [#allocation5], %s218
        %p220 = pneg %p94
        %p221 = pneg %p91
        %p222 = pneg %p120
        %p223 = pneg %p117
        %s224 = sadd.s32 %s25, %s27
        %s225 = smul.u32 2, %s224
        %s226 = sadd.s32 %s25, %s27
        %s227 = smul.u32 2, %s226
        %p229 = scmp.eq.s32.totalorder %s26, 0
        %p230 = scmp.eq.s32.totalorder %s27, 0
        %p231 = pnand %p229, %p230
        %p232 = pneg %p231
        // Predicated region
        $region37: #{tpu_custom_call.1} parent=27 // pred_check
          _
        $region38: #{tpu_custom_call.1} parent=27 // pred_check_branch
          %234 = sbr.rel (%p231) target = $region40
        $region39: #{tpu_custom_call.1} parent=27 // pred_region
          %vm235 = vcmask 27648
          %236 = vst.msk [vmem:[#allocation7] sm:$0xf] %vm235, 0
        $region40: #{tpu_custom_call.1} parent=27 // pred_fallthru
          _
        %v237 = vld [vmem:[%s194] sm:$0xff]
        %vm238 = vcmp.ne.f32.partialorder %v237, %v237
        %v239 = vsel %vm238, inf, %v237
        %v240 = vld [vmem:[%s203] sm:$0x3]
        %v241 = vlaneseq
        %v242 = vshrl.u32 %v241, 7
        %v244 = vcombine.high %v239, %v239
        %vm246 = vcmask 1043456
        %v247 = vsel %vm246, %v239, -inf
        %v248 = vrot.slane %v247, 4
        %v249 = vmax.f32 %v247, %v248
        %v250 = vrot.slane %v249, 2
        %v251 = vmax.f32 %v249, %v250
        %v252 = vrot.slane %v251, 1
        %v253 = vmax.f32 %v251, %v252
        %v254 = vsel %vm246, %v244, -inf
        %v255 = vrot.slane %v254, 4
        %v256 = vmax.f32 %v254, %v255
        %v257 = vrot.slane %v256, 2
        %v258 = vmax.f32 %v256, %v257
        %v259 = vrot.slane %v258, 1
        %v260 = vmax.f32 %v258, %v259
        %v263 = vcombine.low %v253, %v260
        %vm265 = vcmp.eq.f32.partialorder %v239, %v263
        %v267 = vunpack.c.l.s4 839922192
        %v268 = vunpack.c.0.s8 %v267
        %v269 = vlaneseq
        %v270 = vshrl.u32 %v269, 7
        %v271 = vsub.s32 %v268, %v270
        %v272 = vrot.slane %v242, %v271
        %v273 = vsel %vm265, %v272, 4
        %v274 = vcombine.high %v273, %v273
        %v275 = vsel %vm246, %v273, 2147483647
        %v276 = vrot.slane %v275, 4
        %vm277 = vcmp.lt.s32.totalorder %v275, %v276
        %v278 = vsel %vm277, %v275, %v276
        %v279 = vrot.slane %v278, 2
        %vm280 = vcmp.lt.s32.totalorder %v278, %v279
        %v281 = vsel %vm280, %v278, %v279
        %v282 = vrot.slane %v281, 1
        %vm283 = vcmp.lt.s32.totalorder %v281, %v282
        %v284 = vsel %vm283, %v281, %v282
        %v285 = vsel %vm246, %v274, 2147483647
        %v286 = vrot.slane %v285, 4
        %vm287 = vcmp.lt.s32.totalorder %v285, %v286
        %v288 = vsel %vm287, %v285, %v286
        %v289 = vrot.slane %v288, 2
        %vm290 = vcmp.lt.s32.totalorder %v288, %v289
        %v291 = vsel %vm290, %v288, %v289
        %v292 = vrot.slane %v291, 1
        %vm293 = vcmp.lt.s32.totalorder %v291, %v292
        %v294 = vsel %vm293, %v291, %v292
        %vm295 = vcmp.eq.s32.totalorder %v242, %v284
        %vm296 = vcmp.eq.s32.totalorder %v242, %v294
        %v297 = vlaneseq
        %v298 = vshrl.u32 %v297, 7
        %v299 = vsub.s32 0, %v298
        %v300 = vrot.slane %v240, %v299
        %v301 = vlaneseq
        %v302 = vshrl.u32 %v301, 7
        %v303 = vsub.s32 1, %v302
        %v304 = vrot.slane %v240, %v303
        %vm305 = vcmp.eq.s32.totalorder %v242, %v300
        %vm306 = vcmp.eq.s32.totalorder %v242, %v304
        %v307 = vsel %vm305, 1, 0
        %v308 = vsel %vm306, 1, 0
        %v309 = vcvt.s32.f32 %v307
        %v310 = vcvt.s32.f32 %v308
        %v311 = vpack.c.bf16 %v309, %v309
        %v312 = vpack.c.bf16 %v310, %v310
        %v313 = vsel %vm295, 1, 0
        %v314 = vsel %vm296, 1, 0
        %v315 = vcvt.s32.f32 %v313
        %v316 = vcvt.s32.f32 %v314
        %v317 = vpack.c.bf16 %v315, %v315
        %v318 = vpack.c.bf16 %v316, %v316
        %319 = vmatprep.subr.bf16.mxu0 %v312
        %320 = vmatpush1.bf16.xpose.msra.mxu0 %v311
        %321 = vmatprep.subr.bf16.mxu0 0
        %322 = vmatpush1.bf16.xpose.msra.mxu0 0
        %323 = vmatprep.subr.bf16.mxu0 0
        %324 = vmatpush1.bf16.xpose.msra.mxu0 0
        %325 = vmatprep.subr.bf16.mxu0 0
        %326 = vmatpush1.bf16.xpose.msra.mxu0 0
        %327 = vmatprep.subr.bf16.mxu0 0
        %328 = vmatpush1.bf16.xpose.msra.mxu0 0
        %329 = vmatprep.subr.bf16.mxu0 0
        %330 = vmatpush1.bf16.xpose.msra.mxu0 0
        %331 = vmatprep.subr.bf16.mxu0 0
        %332 = vmatpush1.bf16.xpose.msra.mxu0 0
        %333 = vmatprep.subr.bf16.mxu0 0
        %334 = vmatpush1.bf16.xpose.msra.mxu0 0
        %335 = vmatprep.subr.bf16.mxu0 0
        %336 = vmatpush1.bf16.xpose.msra.mxu0 0
        %337 = vmatprep.subr.bf16.mxu0 0
        %338 = vmatpush1.bf16.xpose.msra.mxu0 0
        %339 = vmatprep.subr.bf16.mxu0 0
        %340 = vmatpush1.bf16.xpose.msra.mxu0 0
        %341 = vmatprep.subr.bf16.mxu0 0
        %342 = vmatpush1.bf16.xpose.msra.mxu0 0
        %343 = vmatprep.subr.bf16.mxu0 0
        %344 = vmatpush1.bf16.xpose.msra.mxu0 0
        %345 = vmatprep.subr.bf16.mxu0 0
        %346 = vmatpush1.bf16.xpose.msra.mxu0 0
        %347 = vmatprep.subr.bf16.mxu0 0
        %348 = vmatpush1.bf16.xpose.msra.mxu0 0
        %349 = vmatprep.subr.bf16.mxu0 0
        %350 = vmatpush1.bf16.xpose.msra.mxu0 0
        %351 = vmatprep.mubr.bf16.mxu0 %v318
        %352 = vmatmul.mubr.bf16.gmra.mrb[0].mxu0 %v317
        %v353 = vpop.f32.mrb[0].mxu0
        %v354 = vadd.f32 0.0, %v353
        %v355 = vpop.f32.mrb[0].mxu0
        %v356 = vpop.f32.mrb[0].mxu0
        %v357 = vpop.f32.mrb[0].mxu0
        %358 = vdwg.mxu0
        %v359 = vld [vmem:[#allocation7] sm:$0xf]
        %v360 = vcvt.f32.s32.to.zero.pseudo %v354
        %v361 = vadd.s32 %v359, %v360
        %vm362 = vcmask 27648
        %363 = vst.msk [vmem:[#allocation7] sm:$0xf] %vm362, %v361
        // Predicated region
        $region41: #{tpu_custom_call.1} parent=27 // pred_check
          %p364 = pneg %p117
        $region42: #{tpu_custom_call.1} parent=27 // pred_check_branch
          %366 = sbr.rel (%p364) target = $region44
        $region43: #{tpu_custom_call.1} parent=27 // pred_region
          %s368 = ssub.s32 64, 64
          %369 = vsyncadd [#allocation4], %s368
          %s370 = smul.addr %s25, 64
          %s371 = scalar_lea.hbm %s2, %s370
          %s373 = sshll.u32 [#allocation7], 4
          %s374 = int_to_ptr.vmem [resolvable:$true] %s373
          %376 = dma.vmem_to_hbm [thread:$0]  %s374, 64, %s371, [#allocation4]
        $region44: #{tpu_custom_call.1} parent=27 // pred_fallthru
          _
        // Predicated region
        $region45: #{tpu_custom_call.1} parent=27 // pred_check
          %p377 = pneg %p117
        $region46: #{tpu_custom_call.1} parent=27 // pred_check_branch
          %379 = sbr.rel (%p377) target = $region48
        $region47: #{tpu_custom_call.1} parent=27 // pred_region
          %380 = dma.done [#allocation4], 64
        $region48: #{tpu_custom_call.1} parent=27 // pred_fallthru
          _
      $region28: #{tpu_custom_call.1} parent=5 // pred_fallthru
        _
      %p381 = scmp.le.s32.totalorder 2, %s15
      // Predicated region
      $region49: #{tpu_custom_call.1} parent=5 // pred_check
        %p382 = pneg %p381
      $region50: #{tpu_custom_call.1} parent=5 // pred_check_branch
        %384 = sbr.rel (%p382) target = $region52
      $region51: #{tpu_custom_call.1} parent=5 // pred_region
        %s385 = ssub.s32 %s15, 2
      $region52: #{tpu_custom_call.1} parent=5 // pred_fallthru
        _
    $region6: #{tpu_custom_call.1} parent=1 // loop_footer
      %s19 = sadd.s32 1, %s15
    $region7: #{tpu_custom_call.1} parent=1 // loop_footer_branch
      %14 = sbr.rel target = $region3
    $region8: #{tpu_custom_call.1} parent=1 // loop_exit
      _
    %386 = vsyncpa [#allocation3], 1
    %s387 = scalar_lea.sflag [#allocation3], 1
    %388 = vsyncpa %s387, 1
    %389 = vsyncpa [#allocation6], 1
    %s390 = scalar_lea.sflag [#allocation6], 1
    %391 = vsyncpa %s390, 1
    %392 = vsyncpa [#allocation4], 1
    %s393 = scalar_lea.sflag [#allocation4], 1
    %394 = vsyncpa %s393, 1

</llo_original>
